<compile_context>
chip_gen: v5e
topology: v5e:2x2
jax: 0.10.0
libtpu: 0.0.40
codegen_flags: <defaults>
</compile_context>

<pallas_src>
import jax
import jax.numpy as jnp
from jax.experimental import pallas as pl
from jax.experimental.pallas import tpu as pltpu


def _edge_mlp_kernel(e_ref, p1i_ref, p1j_ref, pfi_ref, pfj_ref,
                     we_ref, w2_ref, b2_ref, wf_ref, ln_ref, o_ref):
    f32 = jnp.float32
    cd = we_ref.dtype                       # matmul-operand dtype (bf16 fast path)
    _, ti, tj, e_in = e_ref.shape
    hdim = w2_ref.shape[0]
    e_out = wf_ref.shape[1]
    rows = ti * tj

    # Edge features for this (i-block, j-block) tile, flattened to rows.
    e2 = e_ref[0].reshape(rows, e_in).astype(cd)

    # One skinny-K MXU push serving both edge terms: W_edge = [W1_e | Wf_e].
    ep = jnp.dot(e2, we_ref[...], preferred_element_type=f32)   # (rows, H + E_out)
    h_e = ep[:, :hdim]          # layer-1 edge term
    y_e = ep[:, hdim:]          # final-layer residual edge term

    # --- trunk layer 1: relu(e@W1_e + node_i@W1_i + node_j@W1_j + b1)
    # b1 is folded into p1i in the wrapper; the node terms are added at
    # (ti, tj, H) so no (rows, H) bias temporary is materialized.
    h = h_e.reshape(ti, tj, hdim) + p1i_ref[0][:, None, :] + p1j_ref[0][None, :, :]
    h = jnp.maximum(h, 0.0).reshape(rows, hdim)

    # --- trunk layer 2: Linear + ReLU
    h = jnp.dot(h.astype(cd), w2_ref[...], preferred_element_type=f32) + b2_ref[...]
    h = jnp.maximum(h, 0.0)

    # --- final layer with residual: (h + x) @ Wf  (b_final folded into pfi)
    y = jnp.dot(h.astype(cd), wf_ref[...], preferred_element_type=f32) + y_e
    y = y.reshape(ti, tj, e_out) + pfi_ref[0][:, None, :] + pfj_ref[0][None, :, :]

    # --- LayerNorm over E_out, in f32 (eps matches torch default 1e-5)
    mean = jnp.mean(y, axis=-1, keepdims=True)
    var = jnp.mean(jnp.square(y - mean), axis=-1, keepdims=True)
    y = (y - mean) * jax.lax.rsqrt(var + 1e-5)
    y = y * ln_ref[0:1, :] + ln_ref[1:2, :]

    o_ref[...] = y.reshape(1, ti, tj, e_out).astype(o_ref.dtype)


def _pick_tile(n, want):
    """Largest divisor of n that is <= want and sublane-friendly.

    Returned tile is a multiple of 8 or equal to n (full dim), satisfying the
    Pallas (8, 128) block-shape rule on the dims where the tile appears
    second-to-last, with no hard assert on the caller's N.
    """
    want = int(max(1, min(want, n)))
    for d in range(want, 0, -1):
        if n % d == 0 and (d % 8 == 0 or d == n):
            return d
    return n


def _vmem_bytes_estimate(ti, tj, e_in, hdim, e_out, cd_bytes, out_bytes):
    """Rough live-VMEM estimate: double-buffered streamed tiles + weights +
    f32 intermediates inside the kernel body."""
    rows = ti * tj
    streamed = 2 * (rows * e_in * cd_bytes            # edge tile
                    + (ti + tj) * hdim * 4            # proj1_i / proj1_j
                    + (ti + tj) * e_out * 4           # projf_i / projf_j
                    + rows * e_out * out_bytes)       # output tile
    weights = 2 * ((e_in * (hdim + e_out) + hdim * hdim + hdim * e_out) * cd_bytes
                   + (hdim + 2 * e_out) * 4)
    interm = (rows * (hdim + e_out) * 4               # combined edge-matmul result
              + 2 * rows * hdim * 4                   # h (layer1 / layer2)
              + 2 * rows * e_out * 4)                 # y / normalized y
    return streamed + weights + interm


def edge_transition_pallas(node_embed, edge_embed, params, *,
                           tile_i=64, tile_j=64,
                           compute_dtype=jnp.bfloat16,
                           out_dtype=None,
                           vmem_budget_bytes=36 * 1024 * 1024,
                           vmem_limit_bytes=48 * 1024 * 1024):
    f32 = jnp.float32
    hi = jax.lax.Precision.HIGHEST
    cd = jnp.dtype(compute_dtype)
    out_dtype = cd if out_dtype is None else jnp.dtype(out_dtype)

    # ---- tiny glue (plain JAX): initial node Linear ----
    node_h = (jnp.dot(node_embed.astype(f32), params["w_init"].astype(f32),
                      precision=hi) + params["b_init"].astype(f32))       # [B,N,Cb]

    B, N, Cb = node_h.shape
    E_in = edge_embed.shape[-1]
    H = 2 * Cb + E_in
    E_out = params["w_final"].shape[-1]

    # ---- split W1 / W_final by input block: x = [edge, node_i, node_j] ----
    w1 = params["w1"].astype(f32)
    wf = params["w_final"].astype(f32)
    w1_e, w1_i, w1_j = w1[:E_in], w1[E_in:E_in + Cb], w1[E_in + Cb:]
    wf_e, wf_i, wf_j = wf[:E_in], wf[E_in:E_in + Cb], wf[E_in + Cb:]

    # Combined skinny-K edge weight: one MXU push covers both edge terms.
    w_edge = jnp.concatenate([w1_e, wf_e], axis=1)                 # (E_in, H+E_out)

    # Tiny per-node projections (this *is* the fused concat), kept in f32.
    # b1 / b_final are folded in once per node (row i) here.
    proj1_i = jnp.dot(node_h, w1_i, precision=hi) + params["b1"].astype(f32)
    proj1_j = jnp.dot(node_h, w1_j, precision=hi)                  # [B, N, H]
    projf_i = jnp.dot(node_h, wf_i, precision=hi) + params["b_final"].astype(f32)
    projf_j = jnp.dot(node_h, wf_j, precision=hi)                  # [B, N, E_out]

    b2 = params["b2"].reshape(1, H).astype(f32)
    ln = jnp.stack([params["ln_gamma"].astype(f32),
                    params["ln_beta"].astype(f32)], axis=0)        # (2, E_out)

    # Edge stream in the compute dtype (halves HBM input traffic on bf16 path).
    edge_in = edge_embed.astype(cd)

    # ---- tile selection with VMEM-budget guard ----
    ti = _pick_tile(N, tile_i)
    tj = _pick_tile(N, tile_j)
    cd_b, out_b = cd.itemsize, out_dtype.itemsize
    while _vmem_bytes_estimate(ti, tj, E_in, H, E_out, cd_b, out_b) > vmem_budget_bytes:
        shrunk = False
        for axis in (0, 1) if ti >= tj else (1, 0):
            cur = ti if axis == 0 else tj
            nt = _pick_tile(N, cur // 2)
            if nt < cur:
                if axis == 0:
                    ti = nt
                else:
                    tj = nt
                shrunk = True
                break
        if not shrunk:
            break

    # Megacore balance: keep >= 2 parallel grid points when possible (v7x 2 TCs).
    if B * (N // ti) * (N // tj) < 2:
        nt = _pick_tile(N, tj // 2)
        if nt < tj:
            tj = nt

    grid = (B, N // ti, N // tj)
    wconst = lambda b, i, j: (0, 0)
    in_specs = [
        pl.BlockSpec((1, ti, tj, E_in), lambda b, i, j: (b, i, j, 0)),  # edge tile
        pl.BlockSpec((1, ti, H),        lambda b, i, j: (b, i, 0)),     # node_i@W1_i + b1
        pl.BlockSpec((1, tj, H),        lambda b, i, j: (b, j, 0)),     # node_j@W1_j
        pl.BlockSpec((1, ti, E_out),    lambda b, i, j: (b, i, 0)),     # node_i@Wf_i + bf
        pl.BlockSpec((1, tj, E_out),    lambda b, i, j: (b, j, 0)),     # node_j@Wf_j
        pl.BlockSpec((E_in, H + E_out), wconst),   # [W1_e | Wf_e]  (VMEM-resident)
        pl.BlockSpec((H, H),            wconst),   # W2
        pl.BlockSpec((1, H),            wconst),   # b2
        pl.BlockSpec((H, E_out),        wconst),   # W_final
        pl.BlockSpec((2, E_out),        wconst),   # [ln_gamma; ln_beta]
    ]
    out_spec = pl.BlockSpec((1, ti, tj, E_out), lambda b, i, j: (b, i, j, 0))

    out = pl.pallas_call(
        _edge_mlp_kernel,
        out_shape=jax.ShapeDtypeStruct((B, N, N, E_out), out_dtype),
        grid_spec=pltpu.PrefetchScalarGridSpec(
            num_scalar_prefetch=0,
            grid=grid,
            in_specs=in_specs,
            out_specs=out_spec),
        compiler_params=pltpu.CompilerParams(
            dimension_semantics=("parallel", "parallel", "parallel"),
            vmem_limit_bytes=int(vmem_limit_bytes)),
    )(edge_in,
      proj1_i, proj1_j, projf_i, projf_j,
      w_edge.astype(cd),
      params["w2"].astype(cd), b2,
      wf.astype(cd), ln)
    return out


def edge_transition_reference(node_embed, edge_embed, params):
    """Pure-JAX f32 reference mirroring the PyTorch forward (highest precision)."""
    f32 = jnp.float32
    hi = jax.lax.Precision.HIGHEST
    node_h = (jnp.dot(node_embed.astype(f32), params["w_init"].astype(f32),
                      precision=hi) + params["b_init"].astype(f32))
    B, N, Cb = node_h.shape
    bias_i = jnp.broadcast_to(node_h[:, :, None, :], (B, N, N, Cb))
    bias_j = jnp.broadcast_to(node_h[:, None, :, :], (B, N, N, Cb))
    x = jnp.concatenate([edge_embed.astype(f32), bias_i, bias_j], axis=-1)
    x = x.reshape(B * N * N, -1)
    h = jnp.maximum(jnp.dot(x, params["w1"], precision=hi) + params["b1"], 0.0)
    h = jnp.maximum(jnp.dot(h, params["w2"], precision=hi) + params["b2"], 0.0)
    y = jnp.dot(h + x, params["w_final"], precision=hi) + params["b_final"]
    mean = jnp.mean(y, axis=-1, keepdims=True)
    var = jnp.mean(jnp.square(y - mean), axis=-1, keepdims=True)
    y = (y - mean) / jnp.sqrt(var + 1e-5)
    y = y * params["ln_gamma"] + params["ln_beta"]
    return y.reshape(B, N, N, -1)


def make_params(key, node_embed_size, edge_embed_in, edge_embed_out,
                node_dilation=2):
    """Deterministic synthetic init (shapes follow EdgeTransition.__init__).

    Note: the real 'final' init zeros the last Linear, which would make the
    output trivially zero; small random weights are used instead so the test
    exercises non-degenerate values.
    """
    bias_embed_size = node_embed_size // node_dilation
    hidden = bias_embed_size * 2 + edge_embed_in
    ks = jax.random.split(key, 4)

    def lin(k, fan_in, fan_out):
        return (jax.random.normal(k, (fan_in, fan_out), jnp.float32)
                / jnp.sqrt(jnp.float32(fan_in)))

    return {
        "w_init": lin(ks[0], node_embed_size, bias_embed_size),
        "b_init": jnp.zeros((bias_embed_size,), jnp.float32),
        "w1": lin(ks[1], hidden, hidden),
        "b1": jnp.zeros((hidden,), jnp.float32),
        "w2": lin(ks[2], hidden, hidden),
        "b2": jnp.zeros((hidden,), jnp.float32),
        "w_final": lin(ks[3], hidden, edge_embed_out),
        "b_final": jnp.zeros((edge_embed_out,), jnp.float32),
        "ln_gamma": jnp.ones((edge_embed_out,), jnp.float32),
        "ln_beta": jnp.zeros((edge_embed_out,), jnp.float32),
    }


if __name__ == "__main__":
    # Small, module-consistent shapes.
    B, N = 2, 8
    node_embed_size = 32      # -> bias_embed_size = 16
    edge_embed_in = 8         # -> hidden = 16*2 + 8 = 40
    edge_embed_out = 16

    key = jax.random.PRNGKey(0)
    k_node, k_edge, k_par = jax.random.split(key, 3)
    node_embed = jax.random.normal(k_node, (B, N, node_embed_size), jnp.float32)
    edge_embed = jax.random.normal(k_edge, (B, N, N, edge_embed_in), jnp.float32)
    params = make_params(k_par, node_embed_size, edge_embed_in, edge_embed_out)

    ref = edge_transition_reference(node_embed, edge_embed, params)

    # Exact-semantics check: f32 compute path, f32 output.
    out_f32 = edge_transition_pallas(node_embed, edge_embed, params,
                                     compute_dtype=jnp.float32,
                                     out_dtype=jnp.float32)
    out_f32 = jax.block_until_ready(out_f32)
    assert out_f32.shape == (B, N, N, edge_embed_out), out_f32.shape
    err_f32 = float(jnp.max(jnp.abs(out_f32 - ref)))
    assert jnp.allclose(out_f32, ref, atol=5e-2, rtol=5e-2), err_f32

    # Performance path: bf16 I/O + bf16 matmul operands, f32 accum / LayerNorm.
    out_bf16 = edge_transition_pallas(node_embed, edge_embed, params,
                                      compute_dtype=jnp.bfloat16)
    out_bf16 = jax.block_until_ready(out_bf16)
    assert out_bf16.shape == (B, N, N, edge_embed_out), out_bf16.shape
    assert out_bf16.dtype == jnp.bfloat16, out_bf16.dtype
    err_bf16 = float(jnp.max(jnp.abs(out_bf16.astype(jnp.float32) - ref)))
    assert jnp.allclose(out_bf16.astype(jnp.float32), ref,
                        atol=2e-1, rtol=2e-1), err_bf16

    print("KERNEL_OK")
</pallas_src>

<mosaic_0001>
module attributes {stable_mosaic.version = 11 : i64} {
  func.func @_edge_mlp_kernel(%arg0: i32, %arg1: i32, %arg2: i32, %arg3: memref<1x8x8x8xf32, #tpu.memory_space<vmem>>, %arg4: memref<1x8x40xf32, #tpu.memory_space<vmem>>, %arg5: memref<1x8x40xf32, #tpu.memory_space<vmem>>, %arg6: memref<1x8x16xf32, #tpu.memory_space<vmem>>, %arg7: memref<1x8x16xf32, #tpu.memory_space<vmem>>, %arg8: memref<8x56xf32, #tpu.memory_space<vmem>>, %arg9: memref<40x40xf32, #tpu.memory_space<vmem>>, %arg10: memref<1x40xf32, #tpu.memory_space<vmem>>, %arg11: memref<40x16xf32, #tpu.memory_space<vmem>>, %arg12: memref<2x16xf32, #tpu.memory_space<vmem>>, %arg13: memref<1x8x8x16xf32, #tpu.memory_space<vmem>>) attributes {dimension_semantics = [#tpu.dimension_semantics<parallel>, #tpu.dimension_semantics<parallel>, #tpu.dimension_semantics<parallel>], iteration_bounds = array<i64: 2, 1, 1>, scalar_prefetch = 0 : i64, scratch_operands = 0 : i64, tpu.core_type = #tpu.core_type<tc>, window_params = [{transform_indices = @transform_0, window_bounds = array<i64: 1, 8, 8, 8>}, {transform_indices = @transform_1, window_bounds = array<i64: 1, 8, 40>}, {transform_indices = @transform_2, window_bounds = array<i64: 1, 8, 40>}, {transform_indices = @transform_3, window_bounds = array<i64: 1, 8, 16>}, {transform_indices = @transform_4, window_bounds = array<i64: 1, 8, 16>}, {pipeline_mode = #tpu.pipeline_mode<synchronous>, transform_indices = @transform_5, window_bounds = array<i64: 8, 56>}, {pipeline_mode = #tpu.pipeline_mode<synchronous>, transform_indices = @transform_6, window_bounds = array<i64: 40, 40>}, {pipeline_mode = #tpu.pipeline_mode<synchronous>, transform_indices = @transform_7, window_bounds = array<i64: 1, 40>}, {pipeline_mode = #tpu.pipeline_mode<synchronous>, transform_indices = @transform_8, window_bounds = array<i64: 40, 16>}, {pipeline_mode = #tpu.pipeline_mode<synchronous>, transform_indices = @transform_9, window_bounds = array<i64: 2, 16>}, {transform_indices = @transform_10, window_bounds = array<i64: 1, 8, 8, 16>}]} {
    %c0 = arith.constant 0 : index
    %c0_0 = arith.constant 0 : index
    %c0_1 = arith.constant 0 : index
    %c0_2 = arith.constant 0 : index
    %0 = vector.load %arg3[%c0, %c0_0, %c0_1, %c0_2] : memref<1x8x8x8xf32, #tpu.memory_space<vmem>>, vector<1x8x8x8xf32>
    %1 = vector.shape_cast %0 : vector<1x8x8x8xf32> to vector<8x8x8xf32>
    %2 = vector.shape_cast %1 : vector<8x8x8xf32> to vector<64x8xf32>
    %c0_3 = arith.constant 0 : index
    %c0_4 = arith.constant 0 : index
    %3 = vector.load %arg8[%c0_3, %c0_4] : memref<8x56xf32, #tpu.memory_space<vmem>>, vector<8x56xf32>
    %cst = arith.constant dense<0.000000e+00> : vector<64x56xf32>
    %4 = tpu.matmul %2, %3, %cst {dimension_numbers = #tpu.dot_dimension_numbers<[1], [0], [0], [1], [0, 0, 1, 1], [], []>} : vector<64x8xf32>, vector<8x56xf32>, vector<64x56xf32> -> vector<64x56xf32>
    %5 = vector.extract_strided_slice %4 {offsets = [0, 0], sizes = [64, 40], strides = [1, 1]} : vector<64x56xf32> to vector<64x40xf32>
    %6 = vector.extract_strided_slice %4 {offsets = [0, 40], sizes = [64, 16], strides = [1, 1]} : vector<64x56xf32> to vector<64x16xf32>
    %7 = vector.shape_cast %5 : vector<64x40xf32> to vector<8x8x40xf32>
    %c0_5 = arith.constant 0 : index
    %c0_6 = arith.constant 0 : index
    %c0_7 = arith.constant 0 : index
    %8 = vector.load %arg4[%c0_5, %c0_6, %c0_7] : memref<1x8x40xf32, #tpu.memory_space<vmem>>, vector<1x8x40xf32>
    %9 = vector.shape_cast %8 : vector<1x8x40xf32> to vector<8x40xf32>
    %10 = vector.shape_cast %9 : vector<8x40xf32> to vector<8x1x40xf32>
    %11 = vector.broadcast %10 : vector<8x1x40xf32> to vector<8x8x40xf32>
    %12 = arith.addf %7, %11 : vector<8x8x40xf32>
    %c0_8 = arith.constant 0 : index
    %c0_9 = arith.constant 0 : index
    %c0_10 = arith.constant 0 : index
    %13 = vector.load %arg5[%c0_8, %c0_9, %c0_10] : memref<1x8x40xf32, #tpu.memory_space<vmem>>, vector<1x8x40xf32>
    %14 = vector.shape_cast %13 : vector<1x8x40xf32> to vector<8x40xf32>
    %15 = vector.shape_cast %14 : vector<8x40xf32> to vector<1x8x40xf32>
    %16 = vector.broadcast %15 : vector<1x8x40xf32> to vector<8x8x40xf32>
    %17 = arith.addf %12, %16 : vector<8x8x40xf32>
    %cst_11 = arith.constant 0.000000e+00 : f32
    %18 = vector.broadcast %cst_11 : f32 to vector<8x8x40xf32>
    %19 = arith.maximumf %17, %18 : vector<8x8x40xf32>
    %20 = vector.shape_cast %19 : vector<8x8x40xf32> to vector<64x40xf32>
    %c0_12 = arith.constant 0 : index
    %c0_13 = arith.constant 0 : index
    %21 = vector.load %arg9[%c0_12, %c0_13] : memref<40x40xf32, #tpu.memory_space<vmem>>, vector<40x40xf32>
    %cst_14 = arith.constant dense<0.000000e+00> : vector<64x40xf32>
    %22 = tpu.matmul %20, %21, %cst_14 {dimension_numbers = #tpu.dot_dimension_numbers<[1], [0], [0], [1], [0, 0, 1, 1], [], []>} : vector<64x40xf32>, vector<40x40xf32>, vector<64x40xf32> -> vector<64x40xf32>
    %c0_15 = arith.constant 0 : index
    %c0_16 = arith.constant 0 : index
    %23 = vector.load %arg10[%c0_15, %c0_16] : memref<1x40xf32, #tpu.memory_space<vmem>>, vector<1x40xf32>
    %24 = vector.broadcast %23 : vector<1x40xf32> to vector<64x40xf32>
    %25 = arith.addf %22, %24 : vector<64x40xf32>
    %cst_17 = arith.constant 0.000000e+00 : f32
    %26 = vector.broadcast %cst_17 : f32 to vector<64x40xf32>
    %27 = arith.maximumf %25, %26 : vector<64x40xf32>
    %c0_18 = arith.constant 0 : index
    %c0_19 = arith.constant 0 : index
    %28 = vector.load %arg11[%c0_18, %c0_19] : memref<40x16xf32, #tpu.memory_space<vmem>>, vector<40x16xf32>
    %cst_20 = arith.constant dense<0.000000e+00> : vector<64x16xf32>
    %29 = tpu.matmul %27, %28, %cst_20 {dimension_numbers = #tpu.dot_dimension_numbers<[1], [0], [0], [1], [0, 0, 1, 1], [], []>} : vector<64x40xf32>, vector<40x16xf32>, vector<64x16xf32> -> vector<64x16xf32>
    %30 = arith.addf %29, %6 : vector<64x16xf32>
    %31 = vector.shape_cast %30 : vector<64x16xf32> to vector<8x8x16xf32>
    %c0_21 = arith.constant 0 : index
    %c0_22 = arith.constant 0 : index
    %c0_23 = arith.constant 0 : index
    %32 = vector.load %arg6[%c0_21, %c0_22, %c0_23] : memref<1x8x16xf32, #tpu.memory_space<vmem>>, vector<1x8x16xf32>
    %33 = vector.shape_cast %32 : vector<1x8x16xf32> to vector<8x16xf32>
    %34 = vector.shape_cast %33 : vector<8x16xf32> to vector<8x1x16xf32>
    %35 = vector.broadcast %34 : vector<8x1x16xf32> to vector<8x8x16xf32>
    %36 = arith.addf %31, %35 : vector<8x8x16xf32>
    %c0_24 = arith.constant 0 : index
    %c0_25 = arith.constant 0 : index
    %c0_26 = arith.constant 0 : index
    %37 = vector.load %arg7[%c0_24, %c0_25, %c0_26] : memref<1x8x16xf32, #tpu.memory_space<vmem>>, vector<1x8x16xf32>
    %38 = vector.shape_cast %37 : vector<1x8x16xf32> to vector<8x16xf32>
    %39 = vector.shape_cast %38 : vector<8x16xf32> to vector<1x8x16xf32>
    %40 = vector.broadcast %39 : vector<1x8x16xf32> to vector<8x8x16xf32>
    %41 = arith.addf %36, %40 : vector<8x8x16xf32>
    %cst_27 = arith.constant dense<0.000000e+00> : vector<8x8xf32>
    %42 = vector.multi_reduction <add>, %41, %cst_27 [2] : vector<8x8x16xf32> to vector<8x8xf32>
    %43 = vector.shape_cast %42 : vector<8x8xf32> to vector<8x8x1xf32>
    %cst_28 = arith.constant 1.600000e+01 : f32
    %44 = vector.broadcast %cst_28 : f32 to vector<8x8x1xf32>
    %45 = arith.divf %43, %44 : vector<8x8x1xf32>
    %46 = vector.broadcast %45 : vector<8x8x1xf32> to vector<8x8x16xf32>
    %47 = arith.subf %41, %46 : vector<8x8x16xf32>
    %48 = arith.mulf %47, %47 : vector<8x8x16xf32>
    %cst_29 = arith.constant dense<0.000000e+00> : vector<8x8xf32>
    %49 = vector.multi_reduction <add>, %48, %cst_29 [2] : vector<8x8x16xf32> to vector<8x8xf32>
    %50 = vector.shape_cast %49 : vector<8x8xf32> to vector<8x8x1xf32>
    %cst_30 = arith.constant 1.600000e+01 : f32
    %51 = vector.broadcast %cst_30 : f32 to vector<8x8x1xf32>
    %52 = arith.divf %50, %51 : vector<8x8x1xf32>
    %53 = vector.broadcast %45 : vector<8x8x1xf32> to vector<8x8x16xf32>
    %54 = arith.subf %41, %53 : vector<8x8x16xf32>
    %cst_31 = arith.constant 9.99999974E-6 : f32
    %55 = vector.broadcast %cst_31 : f32 to vector<8x8x1xf32>
    %56 = arith.addf %52, %55 : vector<8x8x1xf32>
    %57 = math.rsqrt %56 : vector<8x8x1xf32>
    %58 = vector.broadcast %57 : vector<8x8x1xf32> to vector<8x8x16xf32>
    %59 = arith.mulf %54, %58 : vector<8x8x16xf32>
    %c0_32 = arith.constant 0 : index
    %c0_33 = arith.constant 0 : index
    %60 = vector.load %arg12[%c0_32, %c0_33] : memref<2x16xf32, #tpu.memory_space<vmem>>, vector<1x16xf32>
    %61 = vector.shape_cast %60 : vector<1x16xf32> to vector<1x1x16xf32>
    %62 = vector.broadcast %61 : vector<1x1x16xf32> to vector<8x8x16xf32>
    %63 = arith.mulf %59, %62 : vector<8x8x16xf32>
    %c1 = arith.constant 1 : index
    %c0_34 = arith.constant 0 : index
    %64 = vector.load %arg12[%c1, %c0_34] : memref<2x16xf32, #tpu.memory_space<vmem>>, vector<1x16xf32>
    %65 = vector.shape_cast %64 : vector<1x16xf32> to vector<1x1x16xf32>
    %66 = vector.broadcast %65 : vector<1x1x16xf32> to vector<8x8x16xf32>
    %67 = arith.addf %63, %66 : vector<8x8x16xf32>
    %68 = vector.shape_cast %67 : vector<8x8x16xf32> to vector<1x8x8x16xf32>
    %c0_35 = arith.constant 0 : index
    %c0_36 = arith.constant 0 : index
    %c0_37 = arith.constant 0 : index
    %c0_38 = arith.constant 0 : index
    %69 = vector.load %arg13[%c0_35, %c0_36, %c0_37, %c0_38] : memref<1x8x8x16xf32, #tpu.memory_space<vmem>>, vector<1x8x8x16xf32>
    tpu.vector_store %arg13[%c0_35, %c0_36, %c0_37, %c0_38], %68 {strides = array<i32>} : memref<1x8x8x16xf32, #tpu.memory_space<vmem>>, vector<1x8x8x16xf32>,
    return
  }
  func.func @transform_0(%arg0: i32, %arg1: i32, %arg2: i32) -> (i32, i32, i32, i32) {
    %c0_i32 = arith.constant 0 : i32
    %c0_i32_0 = arith.constant 0 : i32
    return %arg0, %arg1, %arg2, %c0_i32 : i32, i32, i32, i32
  }
  func.func @transform_1(%arg0: i32, %arg1: i32, %arg2: i32) -> (i32, i32, i32) {
    %c0_i32 = arith.constant 0 : i32
    %c0_i32_0 = arith.constant 0 : i32
    return %arg0, %arg1, %c0_i32 : i32, i32, i32
  }
  func.func @transform_2(%arg0: i32, %arg1: i32, %arg2: i32) -> (i32, i32, i32) {
    %c0_i32 = arith.constant 0 : i32
    %c0_i32_0 = arith.constant 0 : i32
    return %arg0, %arg2, %c0_i32 : i32, i32, i32
  }
  func.func @transform_3(%arg0: i32, %arg1: i32, %arg2: i32) -> (i32, i32, i32) {
    %c0_i32 = arith.constant 0 : i32
    %c0_i32_0 = arith.constant 0 : i32
    return %arg0, %arg1, %c0_i32 : i32, i32, i32
  }
  func.func @transform_4(%arg0: i32, %arg1: i32, %arg2: i32) -> (i32, i32, i32) {
    %c0_i32 = arith.constant 0 : i32
    %c0_i32_0 = arith.constant 0 : i32
    return %arg0, %arg2, %c0_i32 : i32, i32, i32
  }
  func.func @transform_5(%arg0: i32, %arg1: i32, %arg2: i32) -> (i32, i32) {
    %c0_i32 = arith.constant 0 : i32
    %c0_i32_0 = arith.constant 0 : i32
    %c0_i32_1 = arith.constant 0 : i32
    return %c0_i32, %c0_i32_0 : i32, i32
  }
  func.func @transform_6(%arg0: i32, %arg1: i32, %arg2: i32) -> (i32, i32) {
    %c0_i32 = arith.constant 0 : i32
    %c0_i32_0 = arith.constant 0 : i32
    %c0_i32_1 = arith.constant 0 : i32
    return %c0_i32, %c0_i32_0 : i32, i32
  }
  func.func @transform_7(%arg0: i32, %arg1: i32, %arg2: i32) -> (i32, i32) {
    %c0_i32 = arith.constant 0 : i32
    %c0_i32_0 = arith.constant 0 : i32
    %c0_i32_1 = arith.constant 0 : i32
    return %c0_i32, %c0_i32_0 : i32, i32
  }
  func.func @transform_8(%arg0: i32, %arg1: i32, %arg2: i32) -> (i32, i32) {
    %c0_i32 = arith.constant 0 : i32
    %c0_i32_0 = arith.constant 0 : i32
    %c0_i32_1 = arith.constant 0 : i32
    return %c0_i32, %c0_i32_0 : i32, i32
  }
  func.func @transform_9(%arg0: i32, %arg1: i32, %arg2: i32) -> (i32, i32) {
    %c0_i32 = arith.constant 0 : i32
    %c0_i32_0 = arith.constant 0 : i32
    %c0_i32_1 = arith.constant 0 : i32
    return %c0_i32, %c0_i32_0 : i32, i32
  }
  func.func @transform_10(%arg0: i32, %arg1: i32, %arg2: i32) -> (i32, i32, i32, i32) {
    %c0_i32 = arith.constant 0 : i32
    %c0_i32_0 = arith.constant 0 : i32
    return %arg0, %arg1, %arg2, %c0_i32 : i32, i32, i32, i32
  }
}

</mosaic_0001>

<llo_original>
// kernel: tpu_custom_call.1
$region0: #{tpu_custom_call.1}
  #allocation0 [shape = 'u32[]', space=smem, size = 0x4, offset = 0x4, fixed_abs, tag = 'smem constant byte address 0x4 - core index']
  #allocation1 [shape = 'u32[72,128]{1,0:T(1,128)}', space=vmem, size = 0x9000, scoped, tag = 'internal scratch']
  %s0 = inlined_call_operand.hbm [shape: f32[2,8,8,8], index: 0, kind: input, shape index: {}]
  %s1 = inlined_call_operand.vmem [shape: f32[2,8,40], index: 1, kind: input, shape index: {}]
  %s2 = inlined_call_operand.hbm [shape: f32[2,8,40], index: 2, kind: input, shape index: {}]
  %s3 = inlined_call_operand.hbm [shape: f32[2,8,16], index: 3, kind: input, shape index: {}]
  %s4 = inlined_call_operand.hbm [shape: f32[2,8,16], index: 4, kind: input, shape index: {}]
  %s5 = inlined_call_operand.hbm [shape: f32[8,56], index: 5, kind: input, shape index: {}]
  %s6 = inlined_call_operand.vmem [shape: f32[40,40], index: 6, kind: input, shape index: {}]
  %s7 = inlined_call_operand.vmem [shape: f32[1,40], index: 7, kind: input, shape index: {}]
  %s8 = inlined_call_operand.vmem [shape: f32[40,16], index: 8, kind: input, shape index: {}]
  %s9 = inlined_call_operand.vmem [shape: f32[2,16], index: 9, kind: input, shape index: {}]
  %s10 = inlined_call_operand.hbm [shape: f32[2,8,8,16], index: 10, kind: output, shape index: {}]
  %s11 = sld [smem:[#allocation0]]
  $region93: #{tpu_custom_call.1} parent=0
    _
  %s13 = ssub.s32 1, %s11
  %s14 = scalar_select 0, %s13, %s11
  $region1: #{tpu_custom_call.1} parent=0
    #allocation2 [shape = 'u8[65536]{0}', space=vmem, size = 0x10000, scoped, tag = 'input window, operand 0']
    #allocation3 [shape = 's32[2]{0}', space=sflag, size = 0x8, scoped, tag = 'scoped memory for tpu_custom_call.1']
    #allocation4 [shape = 's32[2]{0}', space=sflag, size = 0x8, scoped, tag = 'scoped memory for tpu_custom_call.1']
    #allocation5 [shape = 'u8[8192]{0}', space=vmem, size = 0x2000, scoped, tag = 'input window, operand 2']
    #allocation6 [shape = 's32[2]{0}', space=sflag, size = 0x8, scoped, tag = 'scoped memory for tpu_custom_call.1']
    #allocation7 [shape = 'u8[8192]{0}', space=vmem, size = 0x2000, scoped, tag = 'input window, operand 3']
    #allocation8 [shape = 'u8[8192]{0}', space=vmem, size = 0x2000, scoped, tag = 'input window, operand 4']
    #allocation9 [shape = 's32[2]{0}', space=sflag, size = 0x8, scoped, tag = 'scoped memory for tpu_custom_call.1']
    #allocation10 [shape = 'u8[4096]{0}', space=vmem, size = 0x1000, scoped, tag = 'input window, operand 5, single buffered']
    #allocation11 [shape = 'u8[65536]{0}', space=vmem, size = 0x10000, scoped, tag = 'output window, operand 0']
    %15 = vsyncpa [#allocation3], 0
    %s16 = scalar_lea.sflag [#allocation3], 1
    %17 = vsyncpa %s16, 0
    %18 = vsyncpa [#allocation6], 0
    %s19 = scalar_lea.sflag [#allocation6], 1
    %20 = vsyncpa %s19, 0
    %21 = vsyncpa [#allocation9], 0
    %s22 = scalar_lea.sflag [#allocation9], 1
    %23 = vsyncpa %s22, 0
    %24 = vsyncpa [#allocation4], 0
    %s25 = scalar_lea.sflag [#allocation4], 1
    %26 = vsyncpa %s25, 0
    loop: start=0, step=1, limit=4
    $region2: #{tpu_custom_call.1} parent=1 // loop_pre_header
      _
    $region3: #{tpu_custom_call.1} parent=1 // loop_header
      %s28 = sphi 0, %s32
      %p29 = scmp.ge.s32.totalorder %s28, 4
      %s35 = sphi 0, %s54
      %s36 = sphi 0, %s50
      %s37 = sphi 0, %s46
      %s38 = sphi 0, %s35
      %s39 = sphi 0, %s36
      %s40 = sphi 0, %s37
      %s41 = sphi 0, %s38
      %s42 = sphi 0, %s39
      %s43 = sphi 0, %s40
      %s61 = sphi 0, %s63
      %s64 = sphi 0, %s61
      %s65 = sphi 0, %s64
      %s81 = sphi 0, %s65
      %s89 = sphi 0, %s91
      %s92 = sphi 0, %s89
      %s93 = sphi 0, %s92
      %s109 = sphi 0, %s93
      %s117 = sphi 0, %s119
      %s120 = sphi 0, %s117
      %s121 = sphi 0, %s120
      %s137 = sphi 0, %s121
      %s145 = sphi 0, %s147
      %s148 = sphi 0, %s145
      %s149 = sphi 0, %s148
      %s165 = sphi 0, %s149
      %s173 = sphi 0, %s175
      %s176 = sphi 0, %s173
      %s177 = sphi 0, %s176
      %s193 = sphi 0, %s177
      %s197 = sphi 0, %s197
      %s199 = sphi 0, %s197
      %s200 = sphi 0, %s199
      %s214 = sphi 0, %s200
      %s218 = sphi 0, %s218
      %s220 = sphi 0, %s218
      %s221 = sphi 0, %s220
      %s235 = sphi 0, %s221
      %s239 = sphi 0, %s239
      %s241 = sphi 0, %s239
      %s242 = sphi 0, %s241
      %s256 = sphi 0, %s242
      %s260 = sphi 0, %s260
      %s262 = sphi 0, %s260
      %s263 = sphi 0, %s262
      %s277 = sphi 0, %s263
      %s281 = sphi 0, %s281
      %s283 = sphi 0, %s281
      %s284 = sphi 0, %s283
      %s298 = sphi 0, %s284
      %s308 = sphi 0, %s310
      %s311 = sphi 0, %s308
      %s312 = sphi 0, %s311
      %s328 = sphi 0, %s312
    $region4: #{tpu_custom_call.1} parent=1 // loop_header_branch
      %31 = sbr.rel (%p29) target = $region8
    $region5: #{tpu_custom_call.1} parent=1 // loop_body
      %s33 = ssub.s32 %s28, 1
      %s34 = ssub.s32 %s28, 2
      %s44 = sadd.s32 1, %s37
      %p45 = scmp.ge.s32.totalorder %s44, 1
      %s46 = scalar_select %p45, 0, %s44
      %s47 = sadd.s32 1, %s36
      %s48 = scalar_select %p45, %s47, %s36
      %p49 = scmp.ge.s32.totalorder %s48, 1
      %s50 = scalar_select %p49, 0, %s48
      %s51 = sadd.s32 1, %s35
      %s52 = scalar_select %p49, %s51, %s35
      %p53 = scmp.ge.s32.totalorder %s52, 2
      %s54 = scalar_select %p53, 0, %s52
      %s55 = ssub.s32 %s35, %s54
      %s56 = ssub.s32 %s36, %s50
      %s57 = sor.u32 %s55, %s56
      %s58 = ssub.s32 %s37, %s46
      %s59 = sor.u32 %s57, %s58
      %p60 = scmp.eq.s32.totalorder %s59, 0
      %s62 = sadd.s32 %s61, 1
      %s63 = scalar_select %p60, %s61, %s62
      %p66 = pneg %p60
      %p67 = scmp.eq.s32.totalorder %s28, 1
      %p68 = por %p66, %p67
      %p69 = scmp.ne.s32.totalorder %s61, %s64
      %p70 = scmp.eq.s32.totalorder %s28, 0
      %p71 = por %p69, %p70
      %p72 = scmp.ne.s32.totalorder %s61, %s64
      %p73 = scmp.eq.s32.totalorder %s33, 1
      %p74 = por %p72, %p73
      %p75 = scmp.ne.s32.totalorder %s64, %s65
      %p76 = scmp.eq.s32.totalorder %s33, 0
      %p77 = por %p75, %p76
      %p78 = scmp.ne.s32.totalorder %s64, %s65
      %p79 = scmp.eq.s32.totalorder %s34, 1
      %p80 = por %p78, %p79
      %p82 = scmp.ne.s32.totalorder %s65, %s81
      %p83 = scmp.eq.s32.totalorder %s34, 0
      %p84 = por %p82, %p83
      %s85 = ssub.s32 %s35, %s54
      %s86 = ssub.s32 %s36, %s50
      %s87 = sor.u32 %s85, %s86
      %p88 = scmp.eq.s32.totalorder %s87, 0
      %s90 = sadd.s32 %s89, 1
      %s91 = scalar_select %p88, %s89, %s90
      %p94 = pneg %p88
      %p95 = scmp.eq.s32.totalorder %s28, 1
      %p96 = por %p94, %p95
      %p97 = scmp.ne.s32.totalorder %s89, %s92
      %p98 = scmp.eq.s32.totalorder %s28, 0
      %p99 = por %p97, %p98
      %p100 = scmp.ne.s32.totalorder %s89, %s92
      %p101 = scmp.eq.s32.totalorder %s33, 1
      %p102 = por %p100, %p101
      %p103 = scmp.ne.s32.totalorder %s92, %s93
      %p104 = scmp.eq.s32.totalorder %s33, 0
      %p105 = por %p103, %p104
      %p106 = scmp.ne.s32.totalorder %s92, %s93
      %p107 = scmp.eq.s32.totalorder %s34, 1
      %p108 = por %p106, %p107
      %p110 = scmp.ne.s32.totalorder %s93, %s109
      %p111 = scmp.eq.s32.totalorder %s34, 0
      %p112 = por %p110, %p111
      %s113 = ssub.s32 %s35, %s54
      %s114 = ssub.s32 %s37, %s46
      %s115 = sor.u32 %s113, %s114
      %p116 = scmp.eq.s32.totalorder %s115, 0
      %s118 = sadd.s32 %s117, 1
      %s119 = scalar_select %p116, %s117, %s118
      %p122 = pneg %p116
      %p123 = scmp.eq.s32.totalorder %s28, 1
      %p124 = por %p122, %p123
      %p125 = scmp.ne.s32.totalorder %s117, %s120
      %p126 = scmp.eq.s32.totalorder %s28, 0
      %p127 = por %p125, %p126
      %p128 = scmp.ne.s32.totalorder %s117, %s120
      %p129 = scmp.eq.s32.totalorder %s33, 1
      %p130 = por %p128, %p129
      %p131 = scmp.ne.s32.totalorder %s120, %s121
      %p132 = scmp.eq.s32.totalorder %s33, 0
      %p133 = por %p131, %p132
      %p134 = scmp.ne.s32.totalorder %s120, %s121
      %p135 = scmp.eq.s32.totalorder %s34, 1
      %p136 = por %p134, %p135
      %p138 = scmp.ne.s32.totalorder %s121, %s137
      %p139 = scmp.eq.s32.totalorder %s34, 0
      %p140 = por %p138, %p139
      %s141 = ssub.s32 %s35, %s54
      %s142 = ssub.s32 %s36, %s50
      %s143 = sor.u32 %s141, %s142
      %p144 = scmp.eq.s32.totalorder %s143, 0
      %s146 = sadd.s32 %s145, 1
      %s147 = scalar_select %p144, %s145, %s146
      %p150 = pneg %p144
      %p151 = scmp.eq.s32.totalorder %s28, 1
      %p152 = por %p150, %p151
      %p153 = scmp.ne.s32.totalorder %s145, %s148
      %p154 = scmp.eq.s32.totalorder %s28, 0
      %p155 = por %p153, %p154
      %p156 = scmp.ne.s32.totalorder %s145, %s148
      %p157 = scmp.eq.s32.totalorder %s33, 1
      %p158 = por %p156, %p157
      %p159 = scmp.ne.s32.totalorder %s148, %s149
      %p160 = scmp.eq.s32.totalorder %s33, 0
      %p161 = por %p159, %p160
      %p162 = scmp.ne.s32.totalorder %s148, %s149
      %p163 = scmp.eq.s32.totalorder %s34, 1
      %p164 = por %p162, %p163
      %p166 = scmp.ne.s32.totalorder %s149, %s165
      %p167 = scmp.eq.s32.totalorder %s34, 0
      %p168 = por %p166, %p167
      %s169 = ssub.s32 %s35, %s54
      %s170 = ssub.s32 %s37, %s46
      %s171 = sor.u32 %s169, %s170
      %p172 = scmp.eq.s32.totalorder %s171, 0
      %s174 = sadd.s32 %s173, 1
      %s175 = scalar_select %p172, %s173, %s174
      %p178 = pneg %p172
      %p179 = scmp.eq.s32.totalorder %s28, 1
      %p180 = por %p178, %p179
      %p181 = scmp.ne.s32.totalorder %s173, %s176
      %p182 = scmp.eq.s32.totalorder %s28, 0
      %p183 = por %p181, %p182
      %p184 = scmp.ne.s32.totalorder %s173, %s176
      %p185 = scmp.eq.s32.totalorder %s33, 1
      %p186 = por %p184, %p185
      %p187 = scmp.ne.s32.totalorder %s176, %s177
      %p188 = scmp.eq.s32.totalorder %s33, 0
      %p189 = por %p187, %p188
      %p190 = scmp.ne.s32.totalorder %s176, %s177
      %p191 = scmp.eq.s32.totalorder %s34, 1
      %p192 = por %p190, %p191
      %p194 = scmp.ne.s32.totalorder %s177, %s193
      %p195 = scmp.eq.s32.totalorder %s34, 0
      %p196 = por %p194, %p195
      %s198 = sadd.s32 %s197, 1
      %p201 = scmp.eq.s32.totalorder %s28, 1
      %p202 = scmp.ne.s32.totalorder %s197, %s199
      %p203 = scmp.eq.s32.totalorder %s28, 0
      %p204 = por %p202, %p203
      %p205 = scmp.ne.s32.totalorder %s197, %s199
      %p206 = scmp.eq.s32.totalorder %s33, 1
      %p207 = por %p205, %p206
      %p208 = scmp.ne.s32.totalorder %s199, %s200
      %p209 = scmp.eq.s32.totalorder %s33, 0
      %p210 = por %p208, %p209
      %p211 = scmp.ne.s32.totalorder %s199, %s200
      %p212 = scmp.eq.s32.totalorder %s34, 1
      %p213 = por %p211, %p212
      %p215 = scmp.ne.s32.totalorder %s200, %s214
      %p216 = scmp.eq.s32.totalorder %s34, 0
      %p217 = por %p215, %p216
      %s219 = sadd.s32 %s218, 1
      %p222 = scmp.eq.s32.totalorder %s28, 1
      %p223 = scmp.ne.s32.totalorder %s218, %s220
      %p224 = scmp.eq.s32.totalorder %s28, 0
      %p225 = por %p223, %p224
      %p226 = scmp.ne.s32.totalorder %s218, %s220
      %p227 = scmp.eq.s32.totalorder %s33, 1
      %p228 = por %p226, %p227
      %p229 = scmp.ne.s32.totalorder %s220, %s221
      %p230 = scmp.eq.s32.totalorder %s33, 0
      %p231 = por %p229, %p230
      %p232 = scmp.ne.s32.totalorder %s220, %s221
      %p233 = scmp.eq.s32.totalorder %s34, 1
      %p234 = por %p232, %p233
      %p236 = scmp.ne.s32.totalorder %s221, %s235
      %p237 = scmp.eq.s32.totalorder %s34, 0
      %p238 = por %p236, %p237
      %s240 = sadd.s32 %s239, 1
      %p243 = scmp.eq.s32.totalorder %s28, 1
      %p244 = scmp.ne.s32.totalorder %s239, %s241
      %p245 = scmp.eq.s32.totalorder %s28, 0
      %p246 = por %p244, %p245
      %p247 = scmp.ne.s32.totalorder %s239, %s241
      %p248 = scmp.eq.s32.totalorder %s33, 1
      %p249 = por %p247, %p248
      %p250 = scmp.ne.s32.totalorder %s241, %s242
      %p251 = scmp.eq.s32.totalorder %s33, 0
      %p252 = por %p250, %p251
      %p253 = scmp.ne.s32.totalorder %s241, %s242
      %p254 = scmp.eq.s32.totalorder %s34, 1
      %p255 = por %p253, %p254
      %p257 = scmp.ne.s32.totalorder %s242, %s256
      %p258 = scmp.eq.s32.totalorder %s34, 0
      %p259 = por %p257, %p258
      %s261 = sadd.s32 %s260, 1
      %p264 = scmp.eq.s32.totalorder %s28, 1
      %p265 = scmp.ne.s32.totalorder %s260, %s262
      %p266 = scmp.eq.s32.totalorder %s28, 0
      %p267 = por %p265, %p266
      %p268 = scmp.ne.s32.totalorder %s260, %s262
      %p269 = scmp.eq.s32.totalorder %s33, 1
      %p270 = por %p268, %p269
      %p271 = scmp.ne.s32.totalorder %s262, %s263
      %p272 = scmp.eq.s32.totalorder %s33, 0
      %p273 = por %p271, %p272
      %p274 = scmp.ne.s32.totalorder %s262, %s263
      %p275 = scmp.eq.s32.totalorder %s34, 1
      %p276 = por %p274, %p275
      %p278 = scmp.ne.s32.totalorder %s263, %s277
      %p279 = scmp.eq.s32.totalorder %s34, 0
      %p280 = por %p278, %p279
      %s282 = sadd.s32 %s281, 1
      %p285 = scmp.eq.s32.totalorder %s28, 1
      %p286 = scmp.ne.s32.totalorder %s281, %s283
      %p287 = scmp.eq.s32.totalorder %s28, 0
      %p288 = por %p286, %p287
      %p289 = scmp.ne.s32.totalorder %s281, %s283
      %p290 = scmp.eq.s32.totalorder %s33, 1
      %p291 = por %p289, %p290
      %p292 = scmp.ne.s32.totalorder %s283, %s284
      %p293 = scmp.eq.s32.totalorder %s33, 0
      %p294 = por %p292, %p293
      %p295 = scmp.ne.s32.totalorder %s283, %s284
      %p296 = scmp.eq.s32.totalorder %s34, 1
      %p297 = por %p295, %p296
      %p299 = scmp.ne.s32.totalorder %s284, %s298
      %p300 = scmp.eq.s32.totalorder %s34, 0
      %p301 = por %p299, %p300
      %s302 = ssub.s32 %s35, %s54
      %s303 = ssub.s32 %s36, %s50
      %s304 = sor.u32 %s302, %s303
      %s305 = ssub.s32 %s37, %s46
      %s306 = sor.u32 %s304, %s305
      %p307 = scmp.eq.s32.totalorder %s306, 0
      %s309 = sadd.s32 %s308, 1
      %s310 = scalar_select %p307, %s308, %s309
      %p313 = pneg %p307
      %p314 = scmp.eq.s32.totalorder %s28, 1
      %p315 = por %p313, %p314
      %p316 = scmp.ne.s32.totalorder %s308, %s311
      %p317 = scmp.eq.s32.totalorder %s28, 0
      %p318 = por %p316, %p317
      %p319 = scmp.ne.s32.totalorder %s308, %s311
      %p320 = scmp.eq.s32.totalorder %s33, 1
      %p321 = por %p319, %p320
      %p322 = scmp.ne.s32.totalorder %s311, %s312
      %p323 = scmp.eq.s32.totalorder %s33, 0
      %p324 = por %p322, %p323
      %p325 = scmp.ne.s32.totalorder %s311, %s312
      %p326 = scmp.eq.s32.totalorder %s34, 1
      %p327 = por %p325, %p326
      %p329 = scmp.ne.s32.totalorder %s312, %s328
      %p330 = scmp.eq.s32.totalorder %s34, 0
      %p331 = por %p329, %p330
      %p332 = scmp.le.s32.totalorder 1, %s28
      %p333 = scmp.lt.s32.totalorder %s28, 3
      %p334 = pnand %p332, %p333
      %p335 = pneg %p334
      // Predicated region
      $region9: #{tpu_custom_call.1} parent=5 // pred_check
        _
      $region10: #{tpu_custom_call.1} parent=5 // pred_check_branch
        %337 = sbr.rel (%p334) target = $region12
      $region11: #{tpu_custom_call.1} parent=5 // pred_region
        %s338 = ssub.s32 %s28, 1
        // Predicated region
        $region13: #{tpu_custom_call.1} parent=11 // pred_check
          %p339 = pneg %p210
        $region14: #{tpu_custom_call.1} parent=11 // pred_check_branch
          %341 = sbr.rel (%p339) target = $region16
        $region15: #{tpu_custom_call.1} parent=11 // pred_region
          %343 = vsyncadd [#allocation9], 0
          %s345 = sshll.u32 %s5, 4
          %s346 = int_to_ptr.hbm [resolvable:$true] %s345
          %s347 = sshll.u32 [#allocation10], 4
          %s348 = int_to_ptr.vmem [resolvable:$true] %s347
          %350 = dma.hbm_to_vmem [thread:$0]  %s346, 128, %s348, [#allocation9]
        $region16: #{tpu_custom_call.1} parent=11 // pred_fallthru
          _
        // Predicated region
        $region17: #{tpu_custom_call.1} parent=11 // pred_check
          %p351 = pneg %p231
        $region18: #{tpu_custom_call.1} parent=11 // pred_check_branch
          %353 = sbr.rel (%p351) target = $region20
        $region19: #{tpu_custom_call.1} parent=11 // pred_region
          _
        $region20: #{tpu_custom_call.1} parent=11 // pred_fallthru
          _
        // Predicated region
        $region21: #{tpu_custom_call.1} parent=11 // pred_check
          %p354 = pneg %p252
        $region22: #{tpu_custom_call.1} parent=11 // pred_check_branch
          %356 = sbr.rel (%p354) target = $region24
        $region23: #{tpu_custom_call.1} parent=11 // pred_region
          _
        $region24: #{tpu_custom_call.1} parent=11 // pred_fallthru
          _
        // Predicated region
        $region25: #{tpu_custom_call.1} parent=11 // pred_check
          %p357 = pneg %p273
        $region26: #{tpu_custom_call.1} parent=11 // pred_check_branch
          %359 = sbr.rel (%p357) target = $region28
        $region27: #{tpu_custom_call.1} parent=11 // pred_region
          _
        $region28: #{tpu_custom_call.1} parent=11 // pred_fallthru
          _
        // Predicated region
        $region29: #{tpu_custom_call.1} parent=11 // pred_check
          %p360 = pneg %p294
        $region30: #{tpu_custom_call.1} parent=11 // pred_check_branch
          %362 = sbr.rel (%p360) target = $region32
        $region31: #{tpu_custom_call.1} parent=11 // pred_region
          _
        $region32: #{tpu_custom_call.1} parent=11 // pred_fallthru
          _
      $region12: #{tpu_custom_call.1} parent=5 // pred_fallthru
        _
      %p363 = scmp.lt.s32.totalorder %s28, 2
      // Predicated region
      $region33: #{tpu_custom_call.1} parent=5 // pred_check
        %p364 = pneg %p363
      $region34: #{tpu_custom_call.1} parent=5 // pred_check_branch
        %366 = sbr.rel (%p364) target = $region36
      $region35: #{tpu_custom_call.1} parent=5 // pred_region
        // Predicated region
        $region37: #{tpu_custom_call.1} parent=35 // pred_check
          %p367 = pneg %p71
        $region38: #{tpu_custom_call.1} parent=35 // pred_check_branch
          %369 = sbr.rel (%p367) target = $region40
        $region39: #{tpu_custom_call.1} parent=35 // pred_region
          %s370 = sand.u32 %s61, 1
          %s371 = scalar_lea.sflag [#allocation3], %s370
          %s372 = sand.u32 %s61, 1
          %s373 = smul.addr %s372, 64
          %s374 = scalar_lea.vmem [#allocation2], %s373
          %s375 = smul.u32 8, %s36
          %377 = vsyncadd %s371, 0
          %s378 = sadd.s32 %s37, %s375
          %s379 = smul.addr %s35, 8
          %s380 = sadd.s32 %s378, %s379
          %s381 = smul.addr %s380, 8
          %s382 = scalar_lea.hbm %s0, %s381
          %s383 = sshll.u32 %s382, 4
          %s384 = int_to_ptr.hbm [resolvable:$true] %s383
          %s385 = sshll.u32 %s374, 4
          %s386 = int_to_ptr.vmem [resolvable:$true] %s385
          %391 = dma.hbm_to_vmem [thread:$0]  %s384, 1024, %s386, %s371, 128, 128, 8
        $region40: #{tpu_custom_call.1} parent=35 // pred_fallthru
          _
        // Predicated region
        $region41: #{tpu_custom_call.1} parent=35 // pred_check
          %p392 = pneg %p99
        $region42: #{tpu_custom_call.1} parent=35 // pred_check_branch
          %394 = sbr.rel (%p392) target = $region44
        $region43: #{tpu_custom_call.1} parent=35 // pred_region
          %p395 = scmp.lt.s32.totalorder %s35, 1
          %s396 = scalar_select %p395, %s35, 1
          %p397 = scmp.lt.s32.totalorder %s36, 0
          %s398 = scalar_select %p397, %s36, 0
          %s399 = sadd.s32 %s398, %s396
          %s400 = smul.addr %s399, 8
          %s401 = scalar_lea.vmem %s1, %s400
        $region44: #{tpu_custom_call.1} parent=35 // pred_fallthru
          _
        // Predicated region
        $region45: #{tpu_custom_call.1} parent=35 // pred_check
          %p402 = pneg %p127
        $region46: #{tpu_custom_call.1} parent=35 // pred_check_branch
          %404 = sbr.rel (%p402) target = $region48
        $region47: #{tpu_custom_call.1} parent=35 // pred_region
          %s405 = sand.u32 %s28, 1
          %s406 = scalar_lea.sflag [#allocation6], %s405
          %s407 = sand.u32 %s117, 1
          %s408 = smul.addr %s407, 8
          %s409 = scalar_lea.vmem [#allocation5], %s408
          %411 = vsyncadd %s406, 0
          %s412 = sadd.s32 %s37, %s35
          %s413 = smul.addr %s412, 8
          %s414 = scalar_lea.hbm %s2, %s413
          %s416 = sshll.u32 %s414, 4
          %s417 = int_to_ptr.hbm [resolvable:$true] %s416
          %s418 = sshll.u32 %s409, 4
          %s419 = int_to_ptr.vmem [resolvable:$true] %s418
          %421 = dma.hbm_to_vmem [thread:$0]  %s417, 128, %s419, %s406
        $region48: #{tpu_custom_call.1} parent=35 // pred_fallthru
          _
        // Predicated region
        $region49: #{tpu_custom_call.1} parent=35 // pred_check
          %p422 = pneg %p155
        $region50: #{tpu_custom_call.1} parent=35 // pred_check_branch
          %424 = sbr.rel (%p422) target = $region52
        $region51: #{tpu_custom_call.1} parent=35 // pred_region
          %s425 = sand.u32 %s28, 1
          %s426 = scalar_lea.sflag [#allocation6], %s425
          %s427 = sand.u32 %s145, 1
          %s428 = smul.addr %s427, 8
          %s429 = scalar_lea.vmem [#allocation7], %s428
          %431 = vsyncadd %s426, 0
          %s432 = sadd.s32 %s36, %s35
          %s433 = smul.addr %s432, 8
          %s434 = scalar_lea.hbm %s3, %s433
          %s436 = sshll.u32 %s434, 4
          %s437 = int_to_ptr.hbm [resolvable:$true] %s436
          %s438 = sshll.u32 %s429, 4
          %s439 = int_to_ptr.vmem [resolvable:$true] %s438
          %441 = dma.hbm_to_vmem [thread:$0]  %s437, 128, %s439, %s426
        $region52: #{tpu_custom_call.1} parent=35 // pred_fallthru
          _
        // Predicated region
        $region53: #{tpu_custom_call.1} parent=35 // pred_check
          %p442 = pneg %p183
        $region54: #{tpu_custom_call.1} parent=35 // pred_check_branch
          %444 = sbr.rel (%p442) target = $region56
        $region55: #{tpu_custom_call.1} parent=35 // pred_region
          %s445 = sand.u32 %s28, 1
          %s446 = scalar_lea.sflag [#allocation9], %s445
          %s447 = sand.u32 %s173, 1
          %s448 = smul.addr %s447, 8
          %s449 = scalar_lea.vmem [#allocation8], %s448
          %451 = vsyncadd %s446, 0
          %s452 = sadd.s32 %s37, %s35
          %s453 = smul.addr %s452, 8
          %s454 = scalar_lea.hbm %s4, %s453
          %s456 = sshll.u32 %s454, 4
          %s457 = int_to_ptr.hbm [resolvable:$true] %s456
          %s458 = sshll.u32 %s449, 4
          %s459 = int_to_ptr.vmem [resolvable:$true] %s458
          %461 = dma.hbm_to_vmem [thread:$0]  %s457, 128, %s459, %s446
        $region56: #{tpu_custom_call.1} parent=35 // pred_fallthru
          _
      $region36: #{tpu_custom_call.1} parent=5 // pred_fallthru
        _
      %p462 = scmp.le.s32.totalorder 1, %s28
      %p463 = scmp.lt.s32.totalorder %s28, 3
      %p464 = pnand %p462, %p463
      %p465 = pneg %p464
      // Predicated region
      $region57: #{tpu_custom_call.1} parent=5 // pred_check
        _
      $region58: #{tpu_custom_call.1} parent=5 // pred_check_branch
        %467 = sbr.rel (%p464) target = $region60
      $region59: #{tpu_custom_call.1} parent=5 // pred_region
        %s468 = ssub.s32 %s28, 1
        %s469 = sand.u32 %s64, 1
        %s470 = scalar_lea.sflag [#allocation3], %s469
        %s471 = sand.u32 %s64, 1
        %s472 = smul.addr %s471, 64
        %s473 = scalar_lea.vmem [#allocation2], %s472
        // Predicated region
        $region61: #{tpu_custom_call.1} parent=59 // pred_check
          %p474 = pneg %p77
        $region62: #{tpu_custom_call.1} parent=59 // pred_check_branch
          %476 = sbr.rel (%p474) target = $region64
        $region63: #{tpu_custom_call.1} parent=59 // pred_region
          %478 = dma.done %s470, 1024
        $region64: #{tpu_custom_call.1} parent=59 // pred_fallthru
          _
        %s479 = sand.u32 %s33, 1
        %s480 = scalar_lea.sflag [#allocation6], %s479
        %s481 = sand.u32 %s120, 1
        %s482 = smul.addr %s481, 8
        %s483 = scalar_lea.vmem [#allocation5], %s482
        // Predicated region
        $region65: #{tpu_custom_call.1} parent=59 // pred_check
          %p484 = pneg %p133
        $region66: #{tpu_custom_call.1} parent=59 // pred_check_branch
          %486 = sbr.rel (%p484) target = $region68
        $region67: #{tpu_custom_call.1} parent=59 // pred_region
          %488 = dma.done %s480, 128
        $region68: #{tpu_custom_call.1} parent=59 // pred_fallthru
          _
        %s489 = sand.u32 %s33, 1
        %s490 = scalar_lea.sflag [#allocation6], %s489
        %s491 = sand.u32 %s148, 1
        %s492 = smul.addr %s491, 8
        %s493 = scalar_lea.vmem [#allocation7], %s492
        // Predicated region
        $region69: #{tpu_custom_call.1} parent=59 // pred_check
          %p494 = pneg %p161
        $region70: #{tpu_custom_call.1} parent=59 // pred_check_branch
          %496 = sbr.rel (%p494) target = $region72
        $region71: #{tpu_custom_call.1} parent=59 // pred_region
          %498 = dma.done %s490, 128
        $region72: #{tpu_custom_call.1} parent=59 // pred_fallthru
          _
        %s499 = sand.u32 %s33, 1
        %s500 = scalar_lea.sflag [#allocation9], %s499
        %s501 = sand.u32 %s176, 1
        %s502 = smul.addr %s501, 8
        %s503 = scalar_lea.vmem [#allocation8], %s502
        // Predicated region
        $region73: #{tpu_custom_call.1} parent=59 // pred_check
          %p504 = pneg %p189
        $region74: #{tpu_custom_call.1} parent=59 // pred_check_branch
          %506 = sbr.rel (%p504) target = $region76
        $region75: #{tpu_custom_call.1} parent=59 // pred_region
          %508 = dma.done %s500, 128
        $region76: #{tpu_custom_call.1} parent=59 // pred_fallthru
          _
        // Predicated region
        $region77: #{tpu_custom_call.1} parent=59 // pred_check
          %p509 = pneg %p210
        $region78: #{tpu_custom_call.1} parent=59 // pred_check_branch
          %511 = sbr.rel (%p509) target = $region80
        $region79: #{tpu_custom_call.1} parent=59 // pred_region
          %513 = dma.done [#allocation9], 128
        $region80: #{tpu_custom_call.1} parent=59 // pred_fallthru
          _
        %s514 = sand.u32 %s64, 1
        %s515 = scalar_lea.sflag [#allocation3], %s514
        %s516 = sand.u32 %s64, 1
        %s517 = smul.addr %s516, 64
        %s518 = scalar_lea.vmem [#allocation2], %s517
        %p519 = pneg %p77
        %p520 = pneg %p74
        %p521 = scmp.lt.s32.totalorder %s38, 1
        %s522 = scalar_select %p521, %s38, 1
        %p523 = scmp.lt.s32.totalorder %s39, 0
        %s524 = scalar_select %p523, %s39, 0
        %s525 = sadd.s32 %s524, %s522
        %s526 = smul.addr %s525, 8
        %s527 = scalar_lea.vmem %s1, %s526
        %p528 = pneg %p105
        %p529 = pneg %p102
        %s530 = sand.u32 %s33, 1
        %s531 = scalar_lea.sflag [#allocation6], %s530
        %s532 = sand.u32 %s120, 1
        %s533 = smul.addr %s532, 8
        %s534 = scalar_lea.vmem [#allocation5], %s533
        %p535 = pneg %p133
        %p536 = pneg %p130
        %s537 = sand.u32 %s33, 1
        %s538 = scalar_lea.sflag [#allocation6], %s537
        %s539 = sand.u32 %s148, 1
        %s540 = smul.addr %s539, 8
        %s541 = scalar_lea.vmem [#allocation7], %s540
        %p542 = pneg %p161
        %p543 = pneg %p158
        %s544 = sand.u32 %s33, 1
        %s545 = scalar_lea.sflag [#allocation9], %s544
        %s546 = sand.u32 %s176, 1
        %s547 = smul.addr %s546, 8
        %s548 = scalar_lea.vmem [#allocation8], %s547
        %p549 = pneg %p189
        %p550 = pneg %p186
        %p551 = pneg %p210
        %p552 = pneg %p207
        %p553 = pneg %p231
        %p554 = pneg %p228
        %p555 = pneg %p252
        %p556 = pneg %p249
        %p557 = pneg %p273
        %p558 = pneg %p270
        %p559 = pneg %p294
        %p560 = pneg %p291
        %p561 = pneg %p324
        %p562 = pneg %p321
        %s563 = sand.u32 %s311, 1
        %s564 = scalar_lea.sflag [#allocation4], %s563
        %s565 = sand.u32 %s311, 1
        %s566 = smul.addr %s565, 64
        %s567 = scalar_lea.vmem [#allocation11], %s566
        %s568 = smul.u32 8, %s39
        %p569 = scmp.lt.s32.totalorder %s38, 1
        %s570 = scalar_select %p569, %s38, 1
        %p571 = scmp.lt.s32.totalorder %s39, 0
        %s572 = scalar_select %p571, %s39, 0
        %s573 = sadd.s32 %s572, %s570
        %s574 = smul.addr %s573, 8
        %s575 = scalar_lea.vmem %s1, %s574
        %s576 = smul.u32 8, %s39
        %v577 = vld [vmem:[%s473] sm:$0xff]
        %v578 = vld [vmem:[%s473 + $0x8] sm:$0xff]
        %v579 = vld [vmem:[%s473 + $0x10] sm:$0xff]
        %v580 = vld [vmem:[%s473 + $0x18] sm:$0xff]
        %v581 = vld [vmem:[%s473 + $0x20] sm:$0xff]
        %v582 = vld [vmem:[%s473 + $0x28] sm:$0xff]
        %v583 = vld [vmem:[%s473 + $0x30] sm:$0xff]
        %v584 = vld [vmem:[%s473 + $0x38] sm:$0xff]
        %v585 = vld [vmem:[#allocation10] sm:$0xff]
        %vm586 = vcmask 64512
        %v588 = vsel %vm586, %v577, 0
        %v591 = vsel %vm586, %v578, 0
        %v594 = vsel %vm586, %v579, 0
        %v597 = vsel %vm586, %v580, 0
        %v600 = vsel %vm586, %v581, 0
        %v603 = vsel %vm586, %v582, 0
        %v606 = vsel %vm586, %v583, 0
        %v609 = vsel %vm586, %v584, 0
        %611 = vmatpush.msra.mxu0 0.0
        %612 = vmatpush.msra.mxu0 0.0
        %613 = vmatpush.msra.mxu0 0.0
        %614 = vmatpush.msra.mxu0 0.0
        %615 = vmatpush.msra.mxu0 0.0
        %616 = vmatpush.msra.mxu0 0.0
        %617 = vmatpush.msra.mxu0 0.0
        %618 = vmatpush.msra.mxu0 0.0
        %619 = vmatpush.msra.mxu0 0.0
        %620 = vmatpush.msra.mxu0 0.0
        %621 = vmatpush.msra.mxu0 0.0
        %622 = vmatpush.msra.mxu0 0.0
        %623 = vmatpush.msra.mxu0 0.0
        %624 = vmatpush.msra.mxu0 0.0
        %625 = vmatpush.msra.mxu0 0.0
        %626 = vmatpush.msra.mxu0 %v585
        %627 = vmatmul.f32.gmra.mxu0 %v588
        %v628 = vpop.f32.mrf.mxu0
        %v629 = vadd.f32 0.0, %v628
        %630 = vmatmul.f32.gmra.mxu0 %v591
        %v631 = vpop.f32.mrf.mxu0
        %v632 = vadd.f32 0.0, %v631
        %633 = vmatmul.f32.gmra.mxu0 %v594
        %v634 = vpop.f32.mrf.mxu0
        %v635 = vadd.f32 0.0, %v634
        %636 = vmatmul.f32.gmra.mxu0 %v597
        %v637 = vpop.f32.mrf.mxu0
        %v638 = vadd.f32 0.0, %v637
        %639 = vmatmul.f32.gmra.mxu0 %v600
        %v640 = vpop.f32.mrf.mxu0
        %v641 = vadd.f32 0.0, %v640
        %642 = vmatmul.f32.gmra.mxu0 %v603
        %v643 = vpop.f32.mrf.mxu0
        %v644 = vadd.f32 0.0, %v643
        %645 = vmatmul.f32.gmra.mxu0 %v606
        %v646 = vpop.f32.mrf.mxu0
        %v647 = vadd.f32 0.0, %v646
        %648 = vmatmul.f32.gmra.mxu0 %v609
        %v649 = vpop.f32.mrf.mxu0
        %v650 = vadd.f32 0.0, %v649
        %651 = vdwg.mxu0
        %v652 = vld [vmem:[%s575] sm:$0xff]
        %v654 = vrot.slane %v652, 1
        %v655 = vrot.slane %v652, 2
        %v656 = vrot.slane %v652, 3
        %v657 = vrot.slane %v652, 4
        %v658 = vrot.slane %v652, 5
        %v659 = vrot.slane %v652, 6
        %v660 = vrot.slane %v652, 7
        %v661 = vperm.slane %v652, 0
        %v662 = vperm.slane %v654, 0
        %v663 = vperm.slane %v655, 0
        %v664 = vperm.slane %v656, 0
        %v665 = vperm.slane %v657, 0
        %v666 = vperm.slane %v658, 0
        %v667 = vperm.slane %v659, 0
        %v668 = vperm.slane %v660, 0
        %v677 = vadd.f32 %v629, %v661
        %v678 = vadd.f32 %v632, %v662
        %v679 = vadd.f32 %v635, %v663
        %v680 = vadd.f32 %v638, %v664
        %v681 = vadd.f32 %v641, %v665
        %v682 = vadd.f32 %v644, %v666
        %v683 = vadd.f32 %v647, %v667
        %v684 = vadd.f32 %v650, %v668
        %v685 = vld [vmem:[%s483] sm:$0xff]
        %v686 = vadd.f32 %v677, %v685
        %v687 = vadd.f32 %v678, %v685
        %v688 = vadd.f32 %v679, %v685
        %v689 = vadd.f32 %v680, %v685
        %v690 = vadd.f32 %v681, %v685
        %v691 = vadd.f32 %v682, %v685
        %v692 = vadd.f32 %v683, %v685
        %v693 = vadd.f32 %v684, %v685
        %v694 = vmax.f32 %v686, 0.0
        %v695 = vmax.f32 %v687, 0.0
        %v696 = vmax.f32 %v688, 0.0
        %v697 = vmax.f32 %v689, 0.0
        %v698 = vmax.f32 %v690, 0.0
        %v699 = vmax.f32 %v691, 0.0
        %v700 = vmax.f32 %v692, 0.0
        %v701 = vmax.f32 %v693, 0.0
        %v702 = vld [vmem:[%s6] sm:$0xff]
        %v703 = vld [vmem:[%s6 + $0x8] sm:$0xff]
        %v704 = vld [vmem:[%s6 + $0x10] sm:$0xff]
        %v705 = vld [vmem:[%s6 + $0x18] sm:$0xff]
        %v706 = vld [vmem:[%s6 + $0x20] sm:$0xff]
        %v707 = vld [vmem:[%s7] sm:$0x1]
        %v709 = vperm.slane %v707, 0
        %vm711 = vcmask 326656
        %v713 = vsel %vm711, %v694, 0
        %v716 = vsel %vm711, %v695, 0
        %v719 = vsel %vm711, %v696, 0
        %v722 = vsel %vm711, %v697, 0
        %v725 = vsel %vm711, %v698, 0
        %v728 = vsel %vm711, %v699, 0
        %v731 = vsel %vm711, %v700, 0
        %v734 = vsel %vm711, %v701, 0
        %736 = vmatpush.msra.mxu0 0.0
        %737 = vmatpush.msra.mxu0 0.0
        %738 = vmatpush.msra.mxu0 0.0
        %739 = vmatpush.msra.mxu0 0.0
        %740 = vmatpush.msra.mxu0 0.0
        %741 = vmatpush.msra.mxu0 0.0
        %742 = vmatpush.msra.mxu0 0.0
        %743 = vmatpush.msra.mxu0 0.0
        %744 = vmatpush.msra.mxu0 0.0
        %745 = vmatpush.msra.mxu0 0.0
        %746 = vmatpush.msra.mxu0 0.0
        %747 = vmatpush.msra.mxu0 %v706
        %748 = vmatpush.msra.mxu0 %v705
        %749 = vmatpush.msra.mxu0 %v704
        %750 = vmatpush.msra.mxu0 %v703
        %751 = vmatpush.msra.mxu0 %v702
        %752 = vmatmul.f32.gmra.mxu0 %v713
        %v753 = vpop.f32.mrf.mxu0
        %v754 = vadd.f32 %v709, %v753
        %755 = vmatmul.f32.gmra.mxu0 %v716
        %v756 = vpop.f32.mrf.mxu0
        %v757 = vadd.f32 %v709, %v756
        %758 = vmatmul.f32.gmra.mxu0 %v719
        %v759 = vpop.f32.mrf.mxu0
        %v760 = vadd.f32 %v709, %v759
        %761 = vmatmul.f32.gmra.mxu0 %v722
        %v762 = vpop.f32.mrf.mxu0
        %v763 = vadd.f32 %v709, %v762
        %764 = vmatmul.f32.gmra.mxu0 %v725
        %v765 = vpop.f32.mrf.mxu0
        %v766 = vadd.f32 %v709, %v765
        %767 = vmatmul.f32.gmra.mxu0 %v728
        %v768 = vpop.f32.mrf.mxu0
        %v769 = vadd.f32 %v709, %v768
        %770 = vmatmul.f32.gmra.mxu0 %v731
        %v771 = vpop.f32.mrf.mxu0
        %v772 = vadd.f32 %v709, %v771
        %773 = vmatmul.f32.gmra.mxu0 %v734
        %v774 = vpop.f32.mrf.mxu0
        %v775 = vadd.f32 %v709, %v774
        %776 = vdwg.mxu0
        %v777 = vmax.f32 %v754, 0.0
        %v778 = vmax.f32 %v757, 0.0
        %v779 = vmax.f32 %v760, 0.0
        %v780 = vmax.f32 %v763, 0.0
        %v781 = vmax.f32 %v766, 0.0
        %v782 = vmax.f32 %v769, 0.0
        %v783 = vmax.f32 %v772, 0.0
        %v784 = vmax.f32 %v775, 0.0
        %v785 = vld [vmem:[%s8] sm:$0xff]
        %v786 = vld [vmem:[%s8 + $0x8] sm:$0xff]
        %v787 = vld [vmem:[%s8 + $0x10] sm:$0xff]
        %v788 = vld [vmem:[%s8 + $0x18] sm:$0xff]
        %v789 = vld [vmem:[%s8 + $0x20] sm:$0xff]
        %798 = vrot.lane.b32.xlu0 %v629, 88
        %v799 = vpop.permute.xlu0 %798
        %800 = vrot.lane.b32.xlu0 %v632, 88
        %v801 = vpop.permute.xlu0 %800
        %802 = vrot.lane.b32.xlu0 %v635, 88
        %v803 = vpop.permute.xlu0 %802
        %804 = vrot.lane.b32.xlu0 %v638, 88
        %v805 = vpop.permute.xlu0 %804
        %806 = vrot.lane.b32.xlu0 %v641, 88
        %v807 = vpop.permute.xlu0 %806
        %808 = vrot.lane.b32.xlu0 %v644, 88
        %v809 = vpop.permute.xlu0 %808
        %810 = vrot.lane.b32.xlu0 %v647, 88
        %v811 = vpop.permute.xlu0 %810
        %812 = vrot.lane.b32.xlu0 %v650, 88
        %v813 = vpop.permute.xlu0 %812
        %v823 = vsel %vm711, %v777, 0
        %v826 = vsel %vm711, %v778, 0
        %v829 = vsel %vm711, %v779, 0
        %v832 = vsel %vm711, %v780, 0
        %v835 = vsel %vm711, %v781, 0
        %v838 = vsel %vm711, %v782, 0
        %v841 = vsel %vm711, %v783, 0
        %v844 = vsel %vm711, %v784, 0
        %846 = vmatpush.msra.mxu0 0.0
        %847 = vmatpush.msra.mxu0 0.0
        %848 = vmatpush.msra.mxu0 0.0
        %849 = vmatpush.msra.mxu0 0.0
        %850 = vmatpush.msra.mxu0 0.0
        %851 = vmatpush.msra.mxu0 0.0
        %852 = vmatpush.msra.mxu0 0.0
        %853 = vmatpush.msra.mxu0 0.0
        %854 = vmatpush.msra.mxu0 0.0
        %855 = vmatpush.msra.mxu0 0.0
        %856 = vmatpush.msra.mxu0 0.0
        %857 = vmatpush.msra.mxu0 %v789
        %858 = vmatpush.msra.mxu0 %v788
        %859 = vmatpush.msra.mxu0 %v787
        %860 = vmatpush.msra.mxu0 %v786
        %861 = vmatpush.msra.mxu0 %v785
        %862 = vmatmul.f32.gmra.mxu0 %v823
        %v863 = vpop.f32.mrf.mxu0
        %v864 = vadd.f32 %v799, %v863
        %865 = vmatmul.f32.gmra.mxu0 %v826
        %v866 = vpop.f32.mrf.mxu0
        %v867 = vadd.f32 %v801, %v866
        %868 = vmatmul.f32.gmra.mxu0 %v829
        %v869 = vpop.f32.mrf.mxu0
        %v870 = vadd.f32 %v803, %v869
        %871 = vmatmul.f32.gmra.mxu0 %v832
        %v872 = vpop.f32.mrf.mxu0
        %v873 = vadd.f32 %v805, %v872
        %874 = vmatmul.f32.gmra.mxu0 %v835
        %v875 = vpop.f32.mrf.mxu0
        %v876 = vadd.f32 %v807, %v875
        %877 = vmatmul.f32.gmra.mxu0 %v838
        %v878 = vpop.f32.mrf.mxu0
        %v879 = vadd.f32 %v809, %v878
        %880 = vmatmul.f32.gmra.mxu0 %v841
        %v881 = vpop.f32.mrf.mxu0
        %v882 = vadd.f32 %v811, %v881
        %883 = vmatmul.f32.gmra.mxu0 %v844
        %v884 = vpop.f32.mrf.mxu0
        %v885 = vadd.f32 %v813, %v884
        %886 = vdwg.mxu0
        %v887 = vld [vmem:[%s493] sm:$0xff]
        %v889 = vrot.slane %v887, 1
        %v890 = vrot.slane %v887, 2
        %v891 = vrot.slane %v887, 3
        %v892 = vrot.slane %v887, 4
        %v893 = vrot.slane %v887, 5
        %v894 = vrot.slane %v887, 6
        %v895 = vrot.slane %v887, 7
        %v896 = vperm.slane %v887, 0
        %v897 = vperm.slane %v889, 0
        %v898 = vperm.slane %v890, 0
        %v899 = vperm.slane %v891, 0
        %v900 = vperm.slane %v892, 0
        %v901 = vperm.slane %v893, 0
        %v902 = vperm.slane %v894, 0
        %v903 = vperm.slane %v895, 0
        %v912 = vadd.f32 %v864, %v896
        %v913 = vadd.f32 %v867, %v897
        %v914 = vadd.f32 %v870, %v898
        %v915 = vadd.f32 %v873, %v899
        %v916 = vadd.f32 %v876, %v900
        %v917 = vadd.f32 %v879, %v901
        %v918 = vadd.f32 %v882, %v902
        %v919 = vadd.f32 %v885, %v903
        %v920 = vld [vmem:[%s503] sm:$0xff]
        %v921 = vadd.f32 %v912, %v920
        %v922 = vadd.f32 %v913, %v920
        %v923 = vadd.f32 %v914, %v920
        %v924 = vadd.f32 %v915, %v920
        %v925 = vadd.f32 %v916, %v920
        %v926 = vadd.f32 %v917, %v920
        %v927 = vadd.f32 %v918, %v920
        %v928 = vadd.f32 %v919, %v920
        %vm929 = vcmask 130048
        %v930 = vsel %vm929, %v921, 0.0
        %931 = vadd.xlane.f32.xlu0 %v930
        %v932 = vpop.xlane.xlu0 %931
        %v933 = vsel %vm929, %v922, 0.0
        %934 = vadd.xlane.f32.xlu0 %v933
        %v935 = vpop.xlane.xlu0 %934
        %v936 = vsel %vm929, %v923, 0.0
        %937 = vadd.xlane.f32.xlu0 %v936
        %v938 = vpop.xlane.xlu0 %937
        %v939 = vsel %vm929, %v924, 0.0
        %940 = vadd.xlane.f32.xlu0 %v939
        %v941 = vpop.xlane.xlu0 %940
        %v942 = vsel %vm929, %v925, 0.0
        %943 = vadd.xlane.f32.xlu0 %v942
        %v944 = vpop.xlane.xlu0 %943
        %v945 = vsel %vm929, %v926, 0.0
        %946 = vadd.xlane.f32.xlu0 %v945
        %v947 = vpop.xlane.xlu0 %946
        %v948 = vsel %vm929, %v927, 0.0
        %949 = vadd.xlane.f32.xlu0 %v948
        %v950 = vpop.xlane.xlu0 %949
        %v951 = vsel %vm929, %v928, 0.0
        %952 = vadd.xlane.f32.xlu0 %v951
        %v953 = vpop.xlane.xlu0 %952
        %v954 = vrcp.pop 16.0
        %v955 = vmul.f32 16.0, %v954
        %v956 = vsub.f32 1.0, %v955
        %v957 = vmul.f32 %v954, %v956
        %v958 = vadd.f32 %v954, %v957
        %vm959 = vweird.f32 %v954
        %v960 = vsel %vm959, %v954, %v958
        %v961 = vmul.f32 %v932, %v960
        %v962 = vmul.f32 %v935, %v960
        %v963 = vmul.f32 %v938, %v960
        %v964 = vmul.f32 %v941, %v960
        %v965 = vmul.f32 %v944, %v960
        %v966 = vmul.f32 %v947, %v960
        %v967 = vmul.f32 %v950, %v960
        %v968 = vmul.f32 %v953, %v960
        %v969 = vsub.f32 %v921, %v961
        %v970 = vsub.f32 %v922, %v962
        %v971 = vsub.f32 %v923, %v963
        %v972 = vsub.f32 %v924, %v964
        %v973 = vsub.f32 %v925, %v965
        %v974 = vsub.f32 %v926, %v966
        %v975 = vsub.f32 %v927, %v967
        %v976 = vsub.f32 %v928, %v968
        %v977 = vmul.f32 %v969, %v969
        %v978 = vmul.f32 %v970, %v970
        %v979 = vmul.f32 %v971, %v971
        %v980 = vmul.f32 %v972, %v972
        %v981 = vmul.f32 %v973, %v973
        %v982 = vmul.f32 %v974, %v974
        %v983 = vmul.f32 %v975, %v975
        %v984 = vmul.f32 %v976, %v976
        %v985 = vsel %vm929, %v977, 0.0
        %986 = vadd.xlane.f32.xlu0 %v985
        %v987 = vpop.xlane.xlu0 %986
        %v988 = vsel %vm929, %v978, 0.0
        %989 = vadd.xlane.f32.xlu0 %v988
        %v990 = vpop.xlane.xlu0 %989
        %v991 = vsel %vm929, %v979, 0.0
        %992 = vadd.xlane.f32.xlu0 %v991
        %v993 = vpop.xlane.xlu0 %992
        %v994 = vsel %vm929, %v980, 0.0
        %995 = vadd.xlane.f32.xlu0 %v994
        %v996 = vpop.xlane.xlu0 %995
        %v997 = vsel %vm929, %v981, 0.0
        %998 = vadd.xlane.f32.xlu0 %v997
        %v999 = vpop.xlane.xlu0 %998
        %v1000 = vsel %vm929, %v982, 0.0
        %1001 = vadd.xlane.f32.xlu0 %v1000
        %v1002 = vpop.xlane.xlu0 %1001
        %v1003 = vsel %vm929, %v983, 0.0
        %1004 = vadd.xlane.f32.xlu0 %v1003
        %v1005 = vpop.xlane.xlu0 %1004
        %v1006 = vsel %vm929, %v984, 0.0
        %1007 = vadd.xlane.f32.xlu0 %v1006
        %v1008 = vpop.xlane.xlu0 %1007
        %v1009 = vmul.f32 %v987, %v960
        %v1010 = vmul.f32 %v990, %v960
        %v1011 = vmul.f32 %v993, %v960
        %v1012 = vmul.f32 %v996, %v960
        %v1013 = vmul.f32 %v999, %v960
        %v1014 = vmul.f32 %v1002, %v960
        %v1015 = vmul.f32 %v1005, %v960
        %v1016 = vmul.f32 %v1008, %v960
        %v1017 = vadd.f32 %v1009, 1e-05
        %v1018 = vadd.f32 %v1010, 1e-05
        %v1019 = vadd.f32 %v1011, 1e-05
        %v1020 = vadd.f32 %v1012, 1e-05
        %v1021 = vadd.f32 %v1013, 1e-05
        %v1022 = vadd.f32 %v1014, 1e-05
        %v1023 = vadd.f32 %v1015, 1e-05
        %v1024 = vadd.f32 %v1016, 1e-05
        %v1025 = vrsqrt.pop %v1017
        %v1026 = vmul.f32 %v1025, %v1017
        %v1027 = vmul.f32 %v1026, %v1025
        %v1028 = vmul.f32 0.5, %v1027
        %v1029 = vsub.f32 1.5, %v1028
        %v1030 = vmul.f32 %v1025, %v1029
        %vm1031 = vweird.f32 %v1017
        %vm1032 = vweird.f32 %v1025
        %vm1033 = vmor %vm1031, %vm1032
        %v1034 = vsel %vm1033, %v1025, %v1030
        %v1035 = vrsqrt.pop %v1018
        %v1036 = vmul.f32 %v1035, %v1018
        %v1037 = vmul.f32 %v1036, %v1035
        %v1038 = vmul.f32 0.5, %v1037
        %v1039 = vsub.f32 1.5, %v1038
        %v1040 = vmul.f32 %v1035, %v1039
        %vm1041 = vweird.f32 %v1018
        %vm1042 = vweird.f32 %v1035
        %vm1043 = vmor %vm1041, %vm1042
        %v1044 = vsel %vm1043, %v1035, %v1040
        %v1045 = vrsqrt.pop %v1019
        %v1046 = vmul.f32 %v1045, %v1019
        %v1047 = vmul.f32 %v1046, %v1045
        %v1048 = vmul.f32 0.5, %v1047
        %v1049 = vsub.f32 1.5, %v1048
        %v1050 = vmul.f32 %v1045, %v1049
        %vm1051 = vweird.f32 %v1019
        %vm1052 = vweird.f32 %v1045
        %vm1053 = vmor %vm1051, %vm1052
        %v1054 = vsel %vm1053, %v1045, %v1050
        %v1055 = vrsqrt.pop %v1020
        %v1056 = vmul.f32 %v1055, %v1020
        %v1057 = vmul.f32 %v1056, %v1055
        %v1058 = vmul.f32 0.5, %v1057
        %v1059 = vsub.f32 1.5, %v1058
        %v1060 = vmul.f32 %v1055, %v1059
        %vm1061 = vweird.f32 %v1020
        %vm1062 = vweird.f32 %v1055
        %vm1063 = vmor %vm1061, %vm1062
        %v1064 = vsel %vm1063, %v1055, %v1060
        %v1065 = vrsqrt.pop %v1021
        %v1066 = vmul.f32 %v1065, %v1021
        %v1067 = vmul.f32 %v1066, %v1065
        %v1068 = vmul.f32 0.5, %v1067
        %v1069 = vsub.f32 1.5, %v1068
        %v1070 = vmul.f32 %v1065, %v1069
        %vm1071 = vweird.f32 %v1021
        %vm1072 = vweird.f32 %v1065
        %vm1073 = vmor %vm1071, %vm1072
        %v1074 = vsel %vm1073, %v1065, %v1070
        %v1075 = vrsqrt.pop %v1022
        %v1076 = vmul.f32 %v1075, %v1022
        %v1077 = vmul.f32 %v1076, %v1075
        %v1078 = vmul.f32 0.5, %v1077
        %v1079 = vsub.f32 1.5, %v1078
        %v1080 = vmul.f32 %v1075, %v1079
        %vm1081 = vweird.f32 %v1022
        %vm1082 = vweird.f32 %v1075
        %vm1083 = vmor %vm1081, %vm1082
        %v1084 = vsel %vm1083, %v1075, %v1080
        %v1085 = vrsqrt.pop %v1023
        %v1086 = vmul.f32 %v1085, %v1023
        %v1087 = vmul.f32 %v1086, %v1085
        %v1088 = vmul.f32 0.5, %v1087
        %v1089 = vsub.f32 1.5, %v1088
        %v1090 = vmul.f32 %v1085, %v1089
        %vm1091 = vweird.f32 %v1023
        %vm1092 = vweird.f32 %v1085
        %vm1093 = vmor %vm1091, %vm1092
        %v1094 = vsel %vm1093, %v1085, %v1090
        %v1095 = vrsqrt.pop %v1024
        %v1096 = vmul.f32 %v1095, %v1024
        %v1097 = vmul.f32 %v1096, %v1095
        %v1098 = vmul.f32 0.5, %v1097
        %v1099 = vsub.f32 1.5, %v1098
        %v1100 = vmul.f32 %v1095, %v1099
        %vm1101 = vweird.f32 %v1024
        %vm1102 = vweird.f32 %v1095
        %vm1103 = vmor %vm1101, %vm1102
        %v1104 = vsel %vm1103, %v1095, %v1100
        %v1105 = vmul.f32 %v969, %v1034
        %v1106 = vmul.f32 %v970, %v1044
        %v1107 = vmul.f32 %v971, %v1054
        %v1108 = vmul.f32 %v972, %v1064
        %v1109 = vmul.f32 %v973, %v1074
        %v1110 = vmul.f32 %v974, %v1084
        %v1111 = vmul.f32 %v975, %v1094
        %v1112 = vmul.f32 %v976, %v1104
        %v1113 = vld [vmem:[%s9] sm:$0x1]
        %v1114 = vperm.slane %v1113, 0
        %v1115 = vmul.f32 %v1105, %v1114
        %v1116 = vmul.f32 %v1106, %v1114
        %v1117 = vmul.f32 %v1107, %v1114
        %v1118 = vmul.f32 %v1108, %v1114
        %v1119 = vmul.f32 %v1109, %v1114
        %v1120 = vmul.f32 %v1110, %v1114
        %v1121 = vmul.f32 %v1111, %v1114
        %v1122 = vmul.f32 %v1112, %v1114
        %v1123 = vld [vmem:[%s9 + $0x1] sm:$0x1]
        %v1124 = vperm.slane %v1123, 0
        %v1125 = vadd.f32 %v1115, %v1124
        %v1126 = vadd.f32 %v1116, %v1124
        %v1127 = vadd.f32 %v1117, %v1124
        %v1128 = vadd.f32 %v1118, %v1124
        %v1129 = vadd.f32 %v1119, %v1124
        %v1130 = vadd.f32 %v1120, %v1124
        %v1131 = vadd.f32 %v1121, %v1124
        %v1132 = vadd.f32 %v1122, %v1124
        %1133 = vst.msk [vmem:[%s567] sm:$0xff] %vm929, %v1125
        %1134 = vst.msk [vmem:[%s567 + $0x8] sm:$0xff] %vm929, %v1126
        %1135 = vst.msk [vmem:[%s567 + $0x10] sm:$0xff] %vm929, %v1127
        %1136 = vst.msk [vmem:[%s567 + $0x18] sm:$0xff] %vm929, %v1128
        %1137 = vst.msk [vmem:[%s567 + $0x20] sm:$0xff] %vm929, %v1129
        %1138 = vst.msk [vmem:[%s567 + $0x28] sm:$0xff] %vm929, %v1130
        %1139 = vst.msk [vmem:[%s567 + $0x30] sm:$0xff] %vm929, %v1131
        %1140 = vst.msk [vmem:[%s567 + $0x38] sm:$0xff] %vm929, %v1132
        %s1141 = sand.u32 %s311, 1
        %s1142 = scalar_lea.sflag [#allocation4], %s1141
        %s1143 = sand.u32 %s311, 1
        %s1144 = smul.addr %s1143, 64
        %s1145 = scalar_lea.vmem [#allocation11], %s1144
        // Predicated region
        $region81: #{tpu_custom_call.1} parent=59 // pred_check
          %p1146 = pneg %p321
        $region82: #{tpu_custom_call.1} parent=59 // pred_check_branch
          %1148 = sbr.rel (%p1146) target = $region84
        $region83: #{tpu_custom_call.1} parent=59 // pred_region
          %s1149 = smul.u32 8, %s39
          %1151 = vsyncadd %s1142, 0
          %s1152 = sadd.s32 %s40, %s1149
          %s1153 = smul.addr %s38, 8
          %s1154 = sadd.s32 %s1152, %s1153
          %s1155 = smul.addr %s1154, 8
          %s1156 = scalar_lea.hbm %s10, %s1155
          %s1157 = sshll.u32 %s1145, 4
          %s1158 = int_to_ptr.vmem [resolvable:$true] %s1157
          %s1159 = sshll.u32 %s1156, 4
          %s1160 = int_to_ptr.hbm [resolvable:$true] %s1159
          %1165 = dma.vmem_to_hbm [thread:$0]  %s1158, 1024, %s1160, %s1142, 128, 128, 8
        $region84: #{tpu_custom_call.1} parent=59 // pred_fallthru
          _
      $region60: #{tpu_custom_call.1} parent=5 // pred_fallthru
        _
      %p1166 = scmp.le.s32.totalorder 2, %s28
      // Predicated region
      $region85: #{tpu_custom_call.1} parent=5 // pred_check
        %p1167 = pneg %p1166
      $region86: #{tpu_custom_call.1} parent=5 // pred_check_branch
        %1169 = sbr.rel (%p1167) target = $region88
      $region87: #{tpu_custom_call.1} parent=5 // pred_region
        %s1170 = ssub.s32 %s28, 2
        // Predicated region
        $region89: #{tpu_custom_call.1} parent=87 // pred_check
          %p1171 = pneg %p327
        $region90: #{tpu_custom_call.1} parent=87 // pred_check_branch
          %1173 = sbr.rel (%p1171) target = $region92
        $region91: #{tpu_custom_call.1} parent=87 // pred_region
          %s1174 = sand.u32 %s312, 1
          %s1175 = scalar_lea.sflag [#allocation4], %s1174
          %s1176 = sand.u32 %s312, 1
          %s1177 = smul.addr %s1176, 64
          %s1178 = scalar_lea.vmem [#allocation11], %s1177
          %1180 = dma.done %s1175, 1024
        $region92: #{tpu_custom_call.1} parent=87 // pred_fallthru
          _
      $region88: #{tpu_custom_call.1} parent=5 // pred_fallthru
        _
    $region6: #{tpu_custom_call.1} parent=1 // loop_footer
      %s32 = sadd.s32 1, %s28
    $region7: #{tpu_custom_call.1} parent=1 // loop_footer_branch
      %27 = sbr.rel target = $region3
    $region8: #{tpu_custom_call.1} parent=1 // loop_exit
      _
    %1181 = vsyncpa [#allocation3], 1
    %s1182 = scalar_lea.sflag [#allocation3], 1
    %1183 = vsyncpa %s1182, 1
    %1184 = vsyncpa [#allocation6], 1
    %s1185 = scalar_lea.sflag [#allocation6], 1
    %1186 = vsyncpa %s1185, 1
    %1187 = vsyncpa [#allocation9], 1
    %s1188 = scalar_lea.sflag [#allocation9], 1
    %1189 = vsyncpa %s1188, 1
    %1190 = vsyncpa [#allocation4], 1
    %s1191 = scalar_lea.sflag [#allocation4], 1
    %1192 = vsyncpa %s1191, 1

</llo_original>
